<compile_context>
chip_gen: v7x
topology: tpu7x:2x2x1
jax: 0.10.0
libtpu: 0.0.40
codegen_flags: <defaults>
</compile_context>

<pallas_src>
import functools

import jax
import jax.numpy as jnp
from jax.experimental import pallas as pl
from jax.experimental.pallas import tpu as pltpu

IN_DIM = 32 * 32          # 1024
HIDS = (256, 128, 64)
OUT_DIM = 10
OUT_PAD = 128             # lane-dense padded output width
BN_EPS = 1e-5


def _bn_fold(gamma, beta, running_mean, running_var, lin_bias, eps=BN_EPS):
    """Fold eval-mode BatchNorm1d (+ preceding Linear bias) into scale/shift.

    bn(x @ W + b) = (x @ W) * scale + (beta - mean*scale + b*scale)
    """
    scale = gamma / jnp.sqrt(running_var + eps)
    shift = beta - running_mean * scale + lin_bias * scale
    return scale, shift


def enhanced_nn_kernel(
    x_ref,
    w1_ref, s1_ref, t1_ref,
    w2_ref, s2_ref, t2_ref,
    w3_ref, s3_ref, t3_ref,
    w4_ref, b4_ref,
    o_ref,
):
    # x tile is bf16 (TB, 1024); all matmuls are bf16 -> f32 accumulate (MXU),
    # BN/ReLU epilogues in f32 (VPU), re-cast to bf16 only for the next dot.
    x = x_ref[...]

    # fc1 -> bn1 -> relu   (dropout1 identity in eval)
    h = jnp.dot(x, w1_ref[...], preferred_element_type=jnp.float32)
    h = jnp.maximum(h * s1_ref[...] + t1_ref[...], 0.0)

    # fc2 -> bn2 -> relu   (dropout2 identity in eval)
    h = jnp.dot(h.astype(jnp.bfloat16), w2_ref[...],
                preferred_element_type=jnp.float32)
    h = jnp.maximum(h * s2_ref[...] + t2_ref[...], 0.0)

    # fc3 -> bn3 -> relu   (dropout3 identity in eval)
    h = jnp.dot(h.astype(jnp.bfloat16), w3_ref[...],
                preferred_element_type=jnp.float32)
    h = jnp.maximum(h * s3_ref[...] + t3_ref[...], 0.0)

    # fc4 (logits, padded to 128 lanes; no activation)
    out = jnp.dot(h.astype(jnp.bfloat16), w4_ref[...],
                  preferred_element_type=jnp.float32) + b4_ref[...]
    o_ref[...] = out.astype(o_ref.dtype)


@functools.partial(jax.jit, static_argnames=("tile_b",))
def enhanced_nn_forward(x, params, *, tile_b=512):
    """x: any shape that flattens to (B, 1024), matching x.view(-1, 32*32)."""
    x2d = x.reshape(-1, IN_DIM)
    B = x2d.shape[0]

    (w1, b1, g1, be1, m1, v1,
     w2, b2, g2, be2, m2, v2,
     w3, b3, g3, be3, m3, v3,
     w4, b4) = params

    # Fold BN (+ linear bias) into per-feature scale/shift (f32).
    s1, t1 = _bn_fold(g1, be1, m1, v1, b1)
    s2, t2 = _bn_fold(g2, be2, m2, v2, b2)
    s3, t3 = _bn_fold(g3, be3, m3, v3, b3)

    def row(v):  # (F,) -> (1, F), f32, TPU-friendly broadcast row
        return v.reshape(1, -1).astype(jnp.float32)

    # bf16 weights for the MXU; halves HBM/VMEM traffic vs f32.
    w1b = w1.astype(jnp.bfloat16)
    w2b = w2.astype(jnp.bfloat16)
    w3b = w3.astype(jnp.bfloat16)
    # Pad the final layer to a lane-dense 128-wide output.
    w4p = jnp.zeros((HIDS[2], OUT_PAD), jnp.bfloat16).at[:, :OUT_DIM].set(
        w4.astype(jnp.bfloat16))
    b4p = jnp.zeros((1, OUT_PAD), jnp.float32).at[0, :OUT_DIM].set(
        b4.astype(jnp.float32))

    # Batch tiling: TB rows per grid step (multiple of 8 sublanes).
    tb = min(tile_b, max(8, ((B + 7) // 8) * 8))
    tb = ((tb + 7) // 8) * 8
    grid_b = pl.cdiv(B, tb)
    b_pad = grid_b * tb
    x_bf16 = x2d.astype(jnp.bfloat16)
    if b_pad != B:
        x_bf16 = jnp.pad(x_bf16, ((0, b_pad - B), (0, 0)))

    const = lambda i: (0, 0)        # weights / rows stay resident across steps
    batch = lambda i: (i, 0)        # batch tile advances with the grid

    in_specs = [
        pl.BlockSpec((tb, IN_DIM), batch),
        pl.BlockSpec((IN_DIM, HIDS[0]), const),
        pl.BlockSpec((1, HIDS[0]), const),
        pl.BlockSpec((1, HIDS[0]), const),
        pl.BlockSpec((HIDS[0], HIDS[1]), const),
        pl.BlockSpec((1, HIDS[1]), const),
        pl.BlockSpec((1, HIDS[1]), const),
        pl.BlockSpec((HIDS[1], HIDS[2]), const),
        pl.BlockSpec((1, HIDS[2]), const),
        pl.BlockSpec((1, HIDS[2]), const),
        pl.BlockSpec((HIDS[2], OUT_PAD), const),
        pl.BlockSpec((1, OUT_PAD), const),
    ]
    out_spec = pl.BlockSpec((tb, OUT_PAD), batch)

    flops = 2 * b_pad * (IN_DIM * HIDS[0] + HIDS[0] * HIDS[1]
                         + HIDS[1] * HIDS[2] + HIDS[2] * OUT_PAD)
    weight_bytes = 2 * (IN_DIM * HIDS[0] + HIDS[0] * HIDS[1]
                        + HIDS[1] * HIDS[2] + HIDS[2] * OUT_PAD)
    bytes_accessed = weight_bytes + b_pad * (IN_DIM * 2 + OUT_PAD * 4)

    out_padded = pl.pallas_call(
        enhanced_nn_kernel,
        out_shape=jax.ShapeDtypeStruct((b_pad, OUT_PAD), jnp.float32),
        grid=(grid_b,),
        in_specs=in_specs,
        out_specs=out_spec,
        compiler_params=pltpu.CompilerParams(
            dimension_semantics=("parallel",),
            vmem_limit_bytes=32 * 1024 * 1024,
        ),
        cost_estimate=pl.CostEstimate(
            flops=flops, transcendentals=0, bytes_accessed=bytes_accessed),
    )(x_bf16, w1b, row(s1), row(t1), w2b, row(s2), row(t2),
      w3b, row(s3), row(t3), w4p, b4p)

    return out_padded[:B, :OUT_DIM]


def init_params(key):
    """Deterministic parameter init matching the module's shapes.

    Linear weights are created as (in, out) so the kernel does x @ W (+ b).
    """
    dims = [(IN_DIM, HIDS[0]), (HIDS[0], HIDS[1]), (HIDS[1], HIDS[2]),
            (HIDS[2], OUT_DIM)]
    keys = jax.random.split(key, 2 * len(dims))
    params = []
    for i, (din, dout) in enumerate(dims):
        bound = 1.0 / (din ** 0.5)  # same bound PyTorch nn.Linear uses
        w = jax.random.uniform(keys[2 * i], (din, dout), jnp.float32, -bound, bound)
        b = jax.random.uniform(keys[2 * i + 1], (dout,), jnp.float32, -bound, bound)
        params.extend([w, b])
        if i < 3:  # BatchNorm1d params for fc1/fc2/fc3
            params.extend([
                jnp.ones((dout,), jnp.float32),   # gamma
                jnp.zeros((dout,), jnp.float32),  # beta
                jnp.zeros((dout,), jnp.float32),  # running_mean
                jnp.ones((dout,), jnp.float32),   # running_var
            ])
    return tuple(params)


def _reference_forward(x, params):
    """Pure-JAX reference (eval semantics) for a quick numerical sanity check."""
    x2d = x.reshape(-1, IN_DIM)
    (w1, b1, g1, be1, m1, v1,
     w2, b2, g2, be2, m2, v2,
     w3, b3, g3, be3, m3, v3,
     w4, b4) = params

    def block(h, w, b, g, be, m, v):
        h = h @ w + b
        h = (h - m) / jnp.sqrt(v + BN_EPS) * g + be
        return jnp.maximum(h, 0.0)

    h = block(x2d, w1, b1, g1, be1, m1, v1)
    h = block(h, w2, b2, g2, be2, m2, v2)
    h = block(h, w3, b3, g3, be3, m3, v3)
    return h @ w4 + b4


if __name__ == "__main__":
    key = jax.random.PRNGKey(0)
    k_params, k_x = jax.random.split(key)

    params = init_params(k_params)
    # Input consistent with x.view(-1, 32*32): grayscale 32x32 images, batch=8.
    x = jax.random.normal(k_x, (8, 1, 32, 32), jnp.float32)

    out = enhanced_nn_forward(x, params)
    out = jax.block_until_ready(out)

    assert out.shape == (8, OUT_DIM), out.shape
    assert bool(jnp.all(jnp.isfinite(out)))

    # Loose tolerance: kernel runs bf16 matmuls, reference is f32.
    ref = _reference_forward(x, params)
    err = float(jnp.max(jnp.abs(out - ref)))
    assert err < 5e-2, f"max abs error vs reference: {err}"

    print("KERNEL_OK")
</pallas_src>

<mosaic_0001>
module attributes {stable_mosaic.version = 11 : i64} {
  func.func @enhanced_nn_kernel(%arg0: i32, %arg1: memref<8x1024xbf16, #tpu.memory_space<vmem>>, %arg2: memref<1024x256xbf16, #tpu.memory_space<vmem>>, %arg3: memref<1x256xf32, #tpu.memory_space<vmem>>, %arg4: memref<1x256xf32, #tpu.memory_space<vmem>>, %arg5: memref<256x128xbf16, #tpu.memory_space<vmem>>, %arg6: memref<1x128xf32, #tpu.memory_space<vmem>>, %arg7: memref<1x128xf32, #tpu.memory_space<vmem>>, %arg8: memref<128x64xbf16, #tpu.memory_space<vmem>>, %arg9: memref<1x64xf32, #tpu.memory_space<vmem>>, %arg10: memref<1x64xf32, #tpu.memory_space<vmem>>, %arg11: memref<64x128xbf16, #tpu.memory_space<vmem>>, %arg12: memref<1x128xf32, #tpu.memory_space<vmem>>, %arg13: memref<8x128xf32, #tpu.memory_space<vmem>>) attributes {dimension_semantics = [#tpu.dimension_semantics<parallel>], iteration_bounds = array<i64: 1>, scalar_prefetch = 0 : i64, scratch_operands = 0 : i64, tpu.core_type = #tpu.core_type<tc>, window_params = [{transform_indices = @transform_0, window_bounds = array<i64: 8, 1024>}, {pipeline_mode = #tpu.pipeline_mode<synchronous>, transform_indices = @transform_1, window_bounds = array<i64: 1024, 256>}, {pipeline_mode = #tpu.pipeline_mode<synchronous>, transform_indices = @transform_2, window_bounds = array<i64: 1, 256>}, {pipeline_mode = #tpu.pipeline_mode<synchronous>, transform_indices = @transform_3, window_bounds = array<i64: 1, 256>}, {pipeline_mode = #tpu.pipeline_mode<synchronous>, transform_indices = @transform_4, window_bounds = array<i64: 256, 128>}, {pipeline_mode = #tpu.pipeline_mode<synchronous>, transform_indices = @transform_5, window_bounds = array<i64: 1, 128>}, {pipeline_mode = #tpu.pipeline_mode<synchronous>, transform_indices = @transform_6, window_bounds = array<i64: 1, 128>}, {pipeline_mode = #tpu.pipeline_mode<synchronous>, transform_indices = @transform_7, window_bounds = array<i64: 128, 64>}, {pipeline_mode = #tpu.pipeline_mode<synchronous>, transform_indices = @transform_8, window_bounds = array<i64: 1, 64>}, {pipeline_mode = #tpu.pipeline_mode<synchronous>, transform_indices = @transform_9, window_bounds = array<i64: 1, 64>}, {pipeline_mode = #tpu.pipeline_mode<synchronous>, transform_indices = @transform_10, window_bounds = array<i64: 64, 128>}, {pipeline_mode = #tpu.pipeline_mode<synchronous>, transform_indices = @transform_11, window_bounds = array<i64: 1, 128>}, {transform_indices = @transform_12, window_bounds = array<i64: 8, 128>}]} {
    %c0 = arith.constant 0 : index
    %c0_0 = arith.constant 0 : index
    %0 = vector.load %arg1[%c0, %c0_0] : memref<8x1024xbf16, #tpu.memory_space<vmem>>, vector<8x1024xbf16>
    %c0_1 = arith.constant 0 : index
    %c0_2 = arith.constant 0 : index
    %1 = vector.load %arg2[%c0_1, %c0_2] : memref<1024x256xbf16, #tpu.memory_space<vmem>>, vector<1024x256xbf16>
    %cst = arith.constant dense<0.000000e+00> : vector<8x256xf32>
    %2 = tpu.matmul %0, %1, %cst {dimension_numbers = #tpu.dot_dimension_numbers<[1], [0], [0], [1], [0, 0, 1, 1], [], []>} : vector<8x1024xbf16>, vector<1024x256xbf16>, vector<8x256xf32> -> vector<8x256xf32>
    %c0_3 = arith.constant 0 : index
    %c0_4 = arith.constant 0 : index
    %3 = vector.load %arg3[%c0_3, %c0_4] : memref<1x256xf32, #tpu.memory_space<vmem>>, vector<1x256xf32>
    %4 = vector.broadcast %3 : vector<1x256xf32> to vector<8x256xf32>
    %5 = arith.mulf %2, %4 : vector<8x256xf32>
    %c0_5 = arith.constant 0 : index
    %c0_6 = arith.constant 0 : index
    %6 = vector.load %arg4[%c0_5, %c0_6] : memref<1x256xf32, #tpu.memory_space<vmem>>, vector<1x256xf32>
    %7 = vector.broadcast %6 : vector<1x256xf32> to vector<8x256xf32>
    %8 = arith.addf %5, %7 : vector<8x256xf32>
    %cst_7 = arith.constant 0.000000e+00 : f32
    %9 = vector.broadcast %cst_7 : f32 to vector<8x256xf32>
    %10 = arith.maximumf %8, %9 : vector<8x256xf32>
    %11 = arith.truncf %10 : vector<8x256xf32> to vector<8x256xbf16>
    %c0_8 = arith.constant 0 : index
    %c0_9 = arith.constant 0 : index
    %12 = vector.load %arg5[%c0_8, %c0_9] : memref<256x128xbf16, #tpu.memory_space<vmem>>, vector<256x128xbf16>
    %cst_10 = arith.constant dense<0.000000e+00> : vector<8x128xf32>
    %13 = tpu.matmul %11, %12, %cst_10 {dimension_numbers = #tpu.dot_dimension_numbers<[1], [0], [0], [1], [0, 0, 1, 1], [], []>} : vector<8x256xbf16>, vector<256x128xbf16>, vector<8x128xf32> -> vector<8x128xf32>
    %c0_11 = arith.constant 0 : index
    %c0_12 = arith.constant 0 : index
    %14 = vector.load %arg6[%c0_11, %c0_12] : memref<1x128xf32, #tpu.memory_space<vmem>>, vector<1x128xf32>
    %15 = vector.broadcast %14 : vector<1x128xf32> to vector<8x128xf32>
    %16 = arith.mulf %13, %15 : vector<8x128xf32>
    %c0_13 = arith.constant 0 : index
    %c0_14 = arith.constant 0 : index
    %17 = vector.load %arg7[%c0_13, %c0_14] : memref<1x128xf32, #tpu.memory_space<vmem>>, vector<1x128xf32>
    %18 = vector.broadcast %17 : vector<1x128xf32> to vector<8x128xf32>
    %19 = arith.addf %16, %18 : vector<8x128xf32>
    %cst_15 = arith.constant 0.000000e+00 : f32
    %20 = vector.broadcast %cst_15 : f32 to vector<8x128xf32>
    %21 = arith.maximumf %19, %20 : vector<8x128xf32>
    %22 = arith.truncf %21 : vector<8x128xf32> to vector<8x128xbf16>
    %c0_16 = arith.constant 0 : index
    %c0_17 = arith.constant 0 : index
    %23 = vector.load %arg8[%c0_16, %c0_17] : memref<128x64xbf16, #tpu.memory_space<vmem>>, vector<128x64xbf16>
    %cst_18 = arith.constant dense<0.000000e+00> : vector<8x64xf32>
    %24 = tpu.matmul %22, %23, %cst_18 {dimension_numbers = #tpu.dot_dimension_numbers<[1], [0], [0], [1], [0, 0, 1, 1], [], []>} : vector<8x128xbf16>, vector<128x64xbf16>, vector<8x64xf32> -> vector<8x64xf32>
    %c0_19 = arith.constant 0 : index
    %c0_20 = arith.constant 0 : index
    %25 = vector.load %arg9[%c0_19, %c0_20] : memref<1x64xf32, #tpu.memory_space<vmem>>, vector<1x64xf32>
    %26 = vector.broadcast %25 : vector<1x64xf32> to vector<8x64xf32>
    %27 = arith.mulf %24, %26 : vector<8x64xf32>
    %c0_21 = arith.constant 0 : index
    %c0_22 = arith.constant 0 : index
    %28 = vector.load %arg10[%c0_21, %c0_22] : memref<1x64xf32, #tpu.memory_space<vmem>>, vector<1x64xf32>
    %29 = vector.broadcast %28 : vector<1x64xf32> to vector<8x64xf32>
    %30 = arith.addf %27, %29 : vector<8x64xf32>
    %cst_23 = arith.constant 0.000000e+00 : f32
    %31 = vector.broadcast %cst_23 : f32 to vector<8x64xf32>
    %32 = arith.maximumf %30, %31 : vector<8x64xf32>
    %33 = arith.truncf %32 : vector<8x64xf32> to vector<8x64xbf16>
    %c0_24 = arith.constant 0 : index
    %c0_25 = arith.constant 0 : index
    %34 = vector.load %arg11[%c0_24, %c0_25] : memref<64x128xbf16, #tpu.memory_space<vmem>>, vector<64x128xbf16>
    %cst_26 = arith.constant dense<0.000000e+00> : vector<8x128xf32>
    %35 = tpu.matmul %33, %34, %cst_26 {dimension_numbers = #tpu.dot_dimension_numbers<[1], [0], [0], [1], [0, 0, 1, 1], [], []>} : vector<8x64xbf16>, vector<64x128xbf16>, vector<8x128xf32> -> vector<8x128xf32>
    %c0_27 = arith.constant 0 : index
    %c0_28 = arith.constant 0 : index
    %36 = vector.load %arg12[%c0_27, %c0_28] : memref<1x128xf32, #tpu.memory_space<vmem>>, vector<1x128xf32>
    %37 = vector.broadcast %36 : vector<1x128xf32> to vector<8x128xf32>
    %38 = arith.addf %35, %37 : vector<8x128xf32>
    %c0_29 = arith.constant 0 : index
    %c0_30 = arith.constant 0 : index
    %39 = vector.load %arg13[%c0_29, %c0_30] : memref<8x128xf32, #tpu.memory_space<vmem>>, vector<8x128xf32>
    tpu.vector_store %arg13[%c0_29, %c0_30], %38 {strides = array<i32>} : memref<8x128xf32, #tpu.memory_space<vmem>>, vector<8x128xf32>,
    return
  }
  func.func @transform_0(%arg0: i32) -> (i32, i32) {
    %c0_i32 = arith.constant 0 : i32
    %c0_i32_0 = arith.constant 0 : i32
    return %arg0, %c0_i32 : i32, i32
  }
  func.func @transform_1(%arg0: i32) -> (i32, i32) {
    %c0_i32 = arith.constant 0 : i32
    %c0_i32_0 = arith.constant 0 : i32
    %c0_i32_1 = arith.constant 0 : i32
    return %c0_i32, %c0_i32_0 : i32, i32
  }
  func.func @transform_2(%arg0: i32) -> (i32, i32) {
    %c0_i32 = arith.constant 0 : i32
    %c0_i32_0 = arith.constant 0 : i32
    %c0_i32_1 = arith.constant 0 : i32
    return %c0_i32, %c0_i32_0 : i32, i32
  }
  func.func @transform_3(%arg0: i32) -> (i32, i32) {
    %c0_i32 = arith.constant 0 : i32
    %c0_i32_0 = arith.constant 0 : i32
    %c0_i32_1 = arith.constant 0 : i32
    return %c0_i32, %c0_i32_0 : i32, i32
  }
  func.func @transform_4(%arg0: i32) -> (i32, i32) {
    %c0_i32 = arith.constant 0 : i32
    %c0_i32_0 = arith.constant 0 : i32
    %c0_i32_1 = arith.constant 0 : i32
    return %c0_i32, %c0_i32_0 : i32, i32
  }
  func.func @transform_5(%arg0: i32) -> (i32, i32) {
    %c0_i32 = arith.constant 0 : i32
    %c0_i32_0 = arith.constant 0 : i32
    %c0_i32_1 = arith.constant 0 : i32
    return %c0_i32, %c0_i32_0 : i32, i32
  }
  func.func @transform_6(%arg0: i32) -> (i32, i32) {
    %c0_i32 = arith.constant 0 : i32
    %c0_i32_0 = arith.constant 0 : i32
    %c0_i32_1 = arith.constant 0 : i32
    return %c0_i32, %c0_i32_0 : i32, i32
  }
  func.func @transform_7(%arg0: i32) -> (i32, i32) {
    %c0_i32 = arith.constant 0 : i32
    %c0_i32_0 = arith.constant 0 : i32
    %c0_i32_1 = arith.constant 0 : i32
    return %c0_i32, %c0_i32_0 : i32, i32
  }
  func.func @transform_8(%arg0: i32) -> (i32, i32) {
    %c0_i32 = arith.constant 0 : i32
    %c0_i32_0 = arith.constant 0 : i32
    %c0_i32_1 = arith.constant 0 : i32
    return %c0_i32, %c0_i32_0 : i32, i32
  }
  func.func @transform_9(%arg0: i32) -> (i32, i32) {
    %c0_i32 = arith.constant 0 : i32
    %c0_i32_0 = arith.constant 0 : i32
    %c0_i32_1 = arith.constant 0 : i32
    return %c0_i32, %c0_i32_0 : i32, i32
  }
  func.func @transform_10(%arg0: i32) -> (i32, i32) {
    %c0_i32 = arith.constant 0 : i32
    %c0_i32_0 = arith.constant 0 : i32
    %c0_i32_1 = arith.constant 0 : i32
    return %c0_i32, %c0_i32_0 : i32, i32
  }
  func.func @transform_11(%arg0: i32) -> (i32, i32) {
    %c0_i32 = arith.constant 0 : i32
    %c0_i32_0 = arith.constant 0 : i32
    %c0_i32_1 = arith.constant 0 : i32
    return %c0_i32, %c0_i32_0 : i32, i32
  }
  func.func @transform_12(%arg0: i32) -> (i32, i32) {
    %c0_i32 = arith.constant 0 : i32
    %c0_i32_0 = arith.constant 0 : i32
    return %arg0, %c0_i32 : i32, i32
  }
}

</mosaic_0001>

<llo_original>
// kernel: enhanced_nn_forward.1
$region0: #{enhanced_nn_forward.1}
  #allocation0 [shape = 'u32[]', space=smem, size = 0x4, offset = 0x4, fixed_abs, tag = 'smem constant byte address 0x4 - core index']
  #allocation1 [shape = 'u32[144,128]{1,0:T(1,128)}', space=vmem, size = 0x12000, scoped, tag = 'internal scratch']
  %s0 = inlined_call_operand.vmem [shape: bf16[8,1024], index: 0, kind: input, shape index: {}]
  %s1 = inlined_call_operand.vmem [shape: bf16[1024,256], index: 1, kind: input, shape index: {}]
  %s2 = inlined_call_operand.vmem [shape: f32[1,256], index: 2, kind: input, shape index: {}]
  %s3 = inlined_call_operand.vmem [shape: f32[1,256], index: 3, kind: input, shape index: {}]
  %s4 = inlined_call_operand.vmem [shape: bf16[256,128], index: 4, kind: input, shape index: {}]
  %s5 = inlined_call_operand.vmem [shape: f32[1,128], index: 5, kind: input, shape index: {}]
  %s6 = inlined_call_operand.vmem [shape: f32[1,128], index: 6, kind: input, shape index: {}]
  %s7 = inlined_call_operand.vmem [shape: bf16[128,64], index: 7, kind: input, shape index: {}]
  %s8 = inlined_call_operand.vmem [shape: f32[1,64], index: 8, kind: input, shape index: {}]
  %s9 = inlined_call_operand.vmem [shape: f32[1,64], index: 9, kind: input, shape index: {}]
  %s10 = inlined_call_operand.vmem [shape: bf16[64,128], index: 10, kind: input, shape index: {}]
  %s11 = inlined_call_operand.vmem [shape: f32[1,128], index: 11, kind: input, shape index: {}]
  %s12 = inlined_call_operand.hbm [shape: f32[8,128], index: 12, kind: output, shape index: {}]
  %s13 = sld [smem:[#allocation0]]
  $region58: #{enhanced_nn_forward.1} parent=0
    _
  %s15 = ssub.s32 1, %s13
  %s16 = scalar_select 0, %s15, %s13
  $region1: #{enhanced_nn_forward.1} parent=0
    #allocation2 [shape = 'u8[4096]{0}', space=vmem, size = 0x1000, scoped, tag = 'output window, operand 0, single buffered']
    #allocation3 [shape = 's32[1]{0}', space=sflag, size = 0x4, scoped, tag = 'scoped memory for enhanced_nn_forward.1']
    %17 = vsyncpa [#allocation3], 0
    // Predicated region
    $region2: #{enhanced_nn_forward.1} parent=1 // pred_check
      _
    $region3: #{enhanced_nn_forward.1} parent=1 // pred_check_branch
      %19 = sbr.rel (0) target = $region5
    $region4: #{enhanced_nn_forward.1} parent=1 // pred_region
      _
    $region5: #{enhanced_nn_forward.1} parent=1 // pred_fallthru
      _
    // Predicated region
    $region6: #{enhanced_nn_forward.1} parent=1 // pred_check
      _
    $region7: #{enhanced_nn_forward.1} parent=1 // pred_check_branch
      %21 = sbr.rel (0) target = $region9
    $region8: #{enhanced_nn_forward.1} parent=1 // pred_region
      _
    $region9: #{enhanced_nn_forward.1} parent=1 // pred_fallthru
      _
    // Predicated region
    $region10: #{enhanced_nn_forward.1} parent=1 // pred_check
      _
    $region11: #{enhanced_nn_forward.1} parent=1 // pred_check_branch
      %23 = sbr.rel (0) target = $region13
    $region12: #{enhanced_nn_forward.1} parent=1 // pred_region
      _
    $region13: #{enhanced_nn_forward.1} parent=1 // pred_fallthru
      _
    // Predicated region
    $region14: #{enhanced_nn_forward.1} parent=1 // pred_check
      _
    $region15: #{enhanced_nn_forward.1} parent=1 // pred_check_branch
      %25 = sbr.rel (0) target = $region17
    $region16: #{enhanced_nn_forward.1} parent=1 // pred_region
      _
    $region17: #{enhanced_nn_forward.1} parent=1 // pred_fallthru
      _
    // Predicated region
    $region18: #{enhanced_nn_forward.1} parent=1 // pred_check
      _
    $region19: #{enhanced_nn_forward.1} parent=1 // pred_check_branch
      %27 = sbr.rel (0) target = $region21
    $region20: #{enhanced_nn_forward.1} parent=1 // pred_region
      _
    $region21: #{enhanced_nn_forward.1} parent=1 // pred_fallthru
      _
    // Predicated region
    $region22: #{enhanced_nn_forward.1} parent=1 // pred_check
      _
    $region23: #{enhanced_nn_forward.1} parent=1 // pred_check_branch
      %29 = sbr.rel (0) target = $region25
    $region24: #{enhanced_nn_forward.1} parent=1 // pred_region
      _
    $region25: #{enhanced_nn_forward.1} parent=1 // pred_fallthru
      _
    // Predicated region
    $region26: #{enhanced_nn_forward.1} parent=1 // pred_check
      _
    $region27: #{enhanced_nn_forward.1} parent=1 // pred_check_branch
      %31 = sbr.rel (0) target = $region29
    $region28: #{enhanced_nn_forward.1} parent=1 // pred_region
      _
    $region29: #{enhanced_nn_forward.1} parent=1 // pred_fallthru
      _
    // Predicated region
    $region30: #{enhanced_nn_forward.1} parent=1 // pred_check
      _
    $region31: #{enhanced_nn_forward.1} parent=1 // pred_check_branch
      %33 = sbr.rel (0) target = $region33
    $region32: #{enhanced_nn_forward.1} parent=1 // pred_region
      _
    $region33: #{enhanced_nn_forward.1} parent=1 // pred_fallthru
      _
    // Predicated region
    $region34: #{enhanced_nn_forward.1} parent=1 // pred_check
      _
    $region35: #{enhanced_nn_forward.1} parent=1 // pred_check_branch
      %35 = sbr.rel (0) target = $region37
    $region36: #{enhanced_nn_forward.1} parent=1 // pred_region
      _
    $region37: #{enhanced_nn_forward.1} parent=1 // pred_fallthru
      _
    // Predicated region
    $region38: #{enhanced_nn_forward.1} parent=1 // pred_check
      _
    $region39: #{enhanced_nn_forward.1} parent=1 // pred_check_branch
      %37 = sbr.rel (0) target = $region41
    $region40: #{enhanced_nn_forward.1} parent=1 // pred_region
      _
    $region41: #{enhanced_nn_forward.1} parent=1 // pred_fallthru
      _
    // Predicated region
    $region42: #{enhanced_nn_forward.1} parent=1 // pred_check
      _
    $region43: #{enhanced_nn_forward.1} parent=1 // pred_check_branch
      %39 = sbr.rel (0) target = $region45
    $region44: #{enhanced_nn_forward.1} parent=1 // pred_region
      _
    $region45: #{enhanced_nn_forward.1} parent=1 // pred_fallthru
      _
    // Predicated region
    $region46: #{enhanced_nn_forward.1} parent=1 // pred_check
      _
    $region47: #{enhanced_nn_forward.1} parent=1 // pred_check_branch
      %41 = sbr.rel (0) target = $region49
    $region48: #{enhanced_nn_forward.1} parent=1 // pred_region
      _
    $region49: #{enhanced_nn_forward.1} parent=1 // pred_fallthru
      _
    %v43 = vld [vmem:[%s0] sm:$0xff]
    %v44 = vld [vmem:[%s0 + $0x8] sm:$0xff]
    %v45 = vld [vmem:[%s0 + $0x10] sm:$0xff]
    %v46 = vld [vmem:[%s0 + $0x18] sm:$0xff]
    %v47 = vld [vmem:[%s1] sm:$0xff]
    %v48 = vld [vmem:[%s1 + $0x8] sm:$0xff]
    %v49 = vld [vmem:[%s1 + $0x10] sm:$0xff]
    %v50 = vld [vmem:[%s1 + $0x18] sm:$0xff]
    %v51 = vld [vmem:[%s1 + $0x20] sm:$0xff]
    %v52 = vld [vmem:[%s1 + $0x28] sm:$0xff]
    %v53 = vld [vmem:[%s1 + $0x30] sm:$0xff]
    %v54 = vld [vmem:[%s1 + $0x38] sm:$0xff]
    %v55 = vld [vmem:[%s1 + $0x40] sm:$0xff]
    %v56 = vld [vmem:[%s1 + $0x48] sm:$0xff]
    %v57 = vld [vmem:[%s1 + $0x50] sm:$0xff]
    %v58 = vld [vmem:[%s1 + $0x58] sm:$0xff]
    %v59 = vld [vmem:[%s1 + $0x60] sm:$0xff]
    %v60 = vld [vmem:[%s1 + $0x68] sm:$0xff]
    %v61 = vld [vmem:[%s1 + $0x70] sm:$0xff]
    %v62 = vld [vmem:[%s1 + $0x78] sm:$0xff]
    %v63 = vld [vmem:[%s1 + $0x80] sm:$0xff]
    %v64 = vld [vmem:[%s1 + $0x88] sm:$0xff]
    %v65 = vld [vmem:[%s1 + $0x90] sm:$0xff]
    %v66 = vld [vmem:[%s1 + $0x98] sm:$0xff]
    %v67 = vld [vmem:[%s1 + $0xa0] sm:$0xff]
    %v68 = vld [vmem:[%s1 + $0xa8] sm:$0xff]
    %v69 = vld [vmem:[%s1 + $0xb0] sm:$0xff]
    %v70 = vld [vmem:[%s1 + $0xb8] sm:$0xff]
    %v71 = vld [vmem:[%s1 + $0xc0] sm:$0xff]
    %v72 = vld [vmem:[%s1 + $0xc8] sm:$0xff]
    %v73 = vld [vmem:[%s1 + $0xd0] sm:$0xff]
    %v74 = vld [vmem:[%s1 + $0xd8] sm:$0xff]
    %v75 = vld [vmem:[%s1 + $0xe0] sm:$0xff]
    %v76 = vld [vmem:[%s1 + $0xe8] sm:$0xff]
    %v77 = vld [vmem:[%s1 + $0xf0] sm:$0xff]
    %v78 = vld [vmem:[%s1 + $0xf8] sm:$0xff]
    %v79 = vld [vmem:[%s1 + $0x100] sm:$0xff]
    %v80 = vld [vmem:[%s1 + $0x108] sm:$0xff]
    %v81 = vld [vmem:[%s1 + $0x110] sm:$0xff]
    %v82 = vld [vmem:[%s1 + $0x118] sm:$0xff]
    %v83 = vld [vmem:[%s1 + $0x120] sm:$0xff]
    %v84 = vld [vmem:[%s1 + $0x128] sm:$0xff]
    %v85 = vld [vmem:[%s1 + $0x130] sm:$0xff]
    %v86 = vld [vmem:[%s1 + $0x138] sm:$0xff]
    %v87 = vld [vmem:[%s1 + $0x140] sm:$0xff]
    %v88 = vld [vmem:[%s1 + $0x148] sm:$0xff]
    %v89 = vld [vmem:[%s1 + $0x150] sm:$0xff]
    %v90 = vld [vmem:[%s1 + $0x158] sm:$0xff]
    %v91 = vld [vmem:[%s1 + $0x160] sm:$0xff]
    %v92 = vld [vmem:[%s1 + $0x168] sm:$0xff]
    %v93 = vld [vmem:[%s1 + $0x170] sm:$0xff]
    %v94 = vld [vmem:[%s1 + $0x178] sm:$0xff]
    %v95 = vld [vmem:[%s1 + $0x180] sm:$0xff]
    %v96 = vld [vmem:[%s1 + $0x188] sm:$0xff]
    %v97 = vld [vmem:[%s1 + $0x190] sm:$0xff]
    %v98 = vld [vmem:[%s1 + $0x198] sm:$0xff]
    %v99 = vld [vmem:[%s1 + $0x1a0] sm:$0xff]
    %v100 = vld [vmem:[%s1 + $0x1a8] sm:$0xff]
    %v101 = vld [vmem:[%s1 + $0x1b0] sm:$0xff]
    %v102 = vld [vmem:[%s1 + $0x1b8] sm:$0xff]
    %v103 = vld [vmem:[%s1 + $0x1c0] sm:$0xff]
    %v104 = vld [vmem:[%s1 + $0x1c8] sm:$0xff]
    %v105 = vld [vmem:[%s1 + $0x1d0] sm:$0xff]
    %v106 = vld [vmem:[%s1 + $0x1d8] sm:$0xff]
    %v107 = vld [vmem:[%s1 + $0x1e0] sm:$0xff]
    %v108 = vld [vmem:[%s1 + $0x1e8] sm:$0xff]
    %v109 = vld [vmem:[%s1 + $0x1f0] sm:$0xff]
    %v110 = vld [vmem:[%s1 + $0x1f8] sm:$0xff]
    %v111 = vld [vmem:[%s1 + $0x200] sm:$0xff]
    %v112 = vld [vmem:[%s1 + $0x208] sm:$0xff]
    %v113 = vld [vmem:[%s1 + $0x210] sm:$0xff]
    %v114 = vld [vmem:[%s1 + $0x218] sm:$0xff]
    %v115 = vld [vmem:[%s1 + $0x220] sm:$0xff]
    %v116 = vld [vmem:[%s1 + $0x228] sm:$0xff]
    %v117 = vld [vmem:[%s1 + $0x230] sm:$0xff]
    %v118 = vld [vmem:[%s1 + $0x238] sm:$0xff]
    %v119 = vld [vmem:[%s1 + $0x240] sm:$0xff]
    %v120 = vld [vmem:[%s1 + $0x248] sm:$0xff]
    %v121 = vld [vmem:[%s1 + $0x250] sm:$0xff]
    %v122 = vld [vmem:[%s1 + $0x258] sm:$0xff]
    %v123 = vld [vmem:[%s1 + $0x260] sm:$0xff]
    %v124 = vld [vmem:[%s1 + $0x268] sm:$0xff]
    %v125 = vld [vmem:[%s1 + $0x270] sm:$0xff]
    %v126 = vld [vmem:[%s1 + $0x278] sm:$0xff]
    %v127 = vld [vmem:[%s1 + $0x280] sm:$0xff]
    %v128 = vld [vmem:[%s1 + $0x288] sm:$0xff]
    %v129 = vld [vmem:[%s1 + $0x290] sm:$0xff]
    %v130 = vld [vmem:[%s1 + $0x298] sm:$0xff]
    %v131 = vld [vmem:[%s1 + $0x2a0] sm:$0xff]
    %v132 = vld [vmem:[%s1 + $0x2a8] sm:$0xff]
    %v133 = vld [vmem:[%s1 + $0x2b0] sm:$0xff]
    %v134 = vld [vmem:[%s1 + $0x2b8] sm:$0xff]
    %v135 = vld [vmem:[%s1 + $0x2c0] sm:$0xff]
    %v136 = vld [vmem:[%s1 + $0x2c8] sm:$0xff]
    %v137 = vld [vmem:[%s1 + $0x2d0] sm:$0xff]
    %v138 = vld [vmem:[%s1 + $0x2d8] sm:$0xff]
    %v139 = vld [vmem:[%s1 + $0x2e0] sm:$0xff]
    %v140 = vld [vmem:[%s1 + $0x2e8] sm:$0xff]
    %v141 = vld [vmem:[%s1 + $0x2f0] sm:$0xff]
    %v142 = vld [vmem:[%s1 + $0x2f8] sm:$0xff]
    %v143 = vld [vmem:[%s1 + $0x300] sm:$0xff]
    %v144 = vld [vmem:[%s1 + $0x308] sm:$0xff]
    %v145 = vld [vmem:[%s1 + $0x310] sm:$0xff]
    %v146 = vld [vmem:[%s1 + $0x318] sm:$0xff]
    %v147 = vld [vmem:[%s1 + $0x320] sm:$0xff]
    %v148 = vld [vmem:[%s1 + $0x328] sm:$0xff]
    %v149 = vld [vmem:[%s1 + $0x330] sm:$0xff]
    %v150 = vld [vmem:[%s1 + $0x338] sm:$0xff]
    %v151 = vld [vmem:[%s1 + $0x340] sm:$0xff]
    %v152 = vld [vmem:[%s1 + $0x348] sm:$0xff]
    %v153 = vld [vmem:[%s1 + $0x350] sm:$0xff]
    %v154 = vld [vmem:[%s1 + $0x358] sm:$0xff]
    %v155 = vld [vmem:[%s1 + $0x360] sm:$0xff]
    %v156 = vld [vmem:[%s1 + $0x368] sm:$0xff]
    %v157 = vld [vmem:[%s1 + $0x370] sm:$0xff]
    %v158 = vld [vmem:[%s1 + $0x378] sm:$0xff]
    %v159 = vld [vmem:[%s1 + $0x380] sm:$0xff]
    %v160 = vld [vmem:[%s1 + $0x388] sm:$0xff]
    %v161 = vld [vmem:[%s1 + $0x390] sm:$0xff]
    %v162 = vld [vmem:[%s1 + $0x398] sm:$0xff]
    %v163 = vld [vmem:[%s1 + $0x3a0] sm:$0xff]
    %v164 = vld [vmem:[%s1 + $0x3a8] sm:$0xff]
    %v165 = vld [vmem:[%s1 + $0x3b0] sm:$0xff]
    %v166 = vld [vmem:[%s1 + $0x3b8] sm:$0xff]
    %v167 = vld [vmem:[%s1 + $0x3c0] sm:$0xff]
    %v168 = vld [vmem:[%s1 + $0x3c8] sm:$0xff]
    %v169 = vld [vmem:[%s1 + $0x3d0] sm:$0xff]
    %v170 = vld [vmem:[%s1 + $0x3d8] sm:$0xff]
    %v171 = vld [vmem:[%s1 + $0x3e0] sm:$0xff]
    %v172 = vld [vmem:[%s1 + $0x3e8] sm:$0xff]
    %v173 = vld [vmem:[%s1 + $0x3f0] sm:$0xff]
    %v174 = vld [vmem:[%s1 + $0x3f8] sm:$0xff]
    %v179 = vunpack.c.l.b16 %v43
    %v180 = vunpack.c.h.b16 %v43
    %v181 = vunpack.c.l.b16 %v44
    %v182 = vunpack.c.h.b16 %v44
    %v183 = vunpack.c.l.b16 %v45
    %v184 = vunpack.c.h.b16 %v45
    %v185 = vunpack.c.l.b16 %v46
    %v186 = vunpack.c.h.b16 %v46
    %v187 = vpack.c.b16 %v179, %v179
    %v188 = vpack.c.b16 %v180, %v180
    %v189 = vpack.c.b16 %v181, %v181
    %v190 = vpack.c.b16 %v182, %v182
    %v191 = vpack.c.b16 %v183, %v183
    %v192 = vpack.c.b16 %v184, %v184
    %v193 = vpack.c.b16 %v185, %v185
    %v194 = vpack.c.b16 %v186, %v186
    %v331 = vunpack.c.l.b16 %v47
    %v332 = vunpack.c.h.b16 %v47
    %v333 = vunpack.c.l.b16 %v48
    %v334 = vunpack.c.h.b16 %v48
    %v335 = vunpack.c.l.b16 %v49
    %v336 = vunpack.c.h.b16 %v49
    %v337 = vunpack.c.l.b16 %v50
    %v338 = vunpack.c.h.b16 %v50
    %v339 = vunpack.c.l.b16 %v51
    %v340 = vunpack.c.h.b16 %v51
    %v341 = vunpack.c.l.b16 %v52
    %v342 = vunpack.c.h.b16 %v52
    %v343 = vunpack.c.l.b16 %v53
    %v344 = vunpack.c.h.b16 %v53
    %v345 = vunpack.c.l.b16 %v54
    %v346 = vunpack.c.h.b16 %v54
    %v347 = vunpack.c.l.b16 %v55
    %v348 = vunpack.c.h.b16 %v55
    %v349 = vunpack.c.l.b16 %v56
    %v350 = vunpack.c.h.b16 %v56
    %v351 = vunpack.c.l.b16 %v57
    %v352 = vunpack.c.h.b16 %v57
    %v353 = vunpack.c.l.b16 %v58
    %v354 = vunpack.c.h.b16 %v58
    %v355 = vunpack.c.l.b16 %v59
    %v356 = vunpack.c.h.b16 %v59
    %v357 = vunpack.c.l.b16 %v60
    %v358 = vunpack.c.h.b16 %v60
    %v359 = vunpack.c.l.b16 %v61
    %v360 = vunpack.c.h.b16 %v61
    %v361 = vunpack.c.l.b16 %v62
    %v362 = vunpack.c.h.b16 %v62
    %v363 = vunpack.c.l.b16 %v63
    %v364 = vunpack.c.h.b16 %v63
    %v365 = vunpack.c.l.b16 %v64
    %v366 = vunpack.c.h.b16 %v64
    %v367 = vunpack.c.l.b16 %v65
    %v368 = vunpack.c.h.b16 %v65
    %v369 = vunpack.c.l.b16 %v66
    %v370 = vunpack.c.h.b16 %v66
    %v371 = vunpack.c.l.b16 %v67
    %v372 = vunpack.c.h.b16 %v67
    %v373 = vunpack.c.l.b16 %v68
    %v374 = vunpack.c.h.b16 %v68
    %v375 = vunpack.c.l.b16 %v69
    %v376 = vunpack.c.h.b16 %v69
    %v377 = vunpack.c.l.b16 %v70
    %v378 = vunpack.c.h.b16 %v70
    %v379 = vunpack.c.l.b16 %v71
    %v380 = vunpack.c.h.b16 %v71
    %v381 = vunpack.c.l.b16 %v72
    %v382 = vunpack.c.h.b16 %v72
    %v383 = vunpack.c.l.b16 %v73
    %v384 = vunpack.c.h.b16 %v73
    %v385 = vunpack.c.l.b16 %v74
    %v386 = vunpack.c.h.b16 %v74
    %v387 = vunpack.c.l.b16 %v75
    %v388 = vunpack.c.h.b16 %v75
    %v389 = vunpack.c.l.b16 %v76
    %v390 = vunpack.c.h.b16 %v76
    %v391 = vunpack.c.l.b16 %v77
    %v392 = vunpack.c.h.b16 %v77
    %v393 = vunpack.c.l.b16 %v78
    %v394 = vunpack.c.h.b16 %v78
    %v395 = vunpack.c.l.b16 %v79
    %v396 = vunpack.c.h.b16 %v79
    %v397 = vunpack.c.l.b16 %v80
    %v398 = vunpack.c.h.b16 %v80
    %v399 = vunpack.c.l.b16 %v81
    %v400 = vunpack.c.h.b16 %v81
    %v401 = vunpack.c.l.b16 %v82
    %v402 = vunpack.c.h.b16 %v82
    %v403 = vunpack.c.l.b16 %v83
    %v404 = vunpack.c.h.b16 %v83
    %v405 = vunpack.c.l.b16 %v84
    %v406 = vunpack.c.h.b16 %v84
    %v407 = vunpack.c.l.b16 %v85
    %v408 = vunpack.c.h.b16 %v85
    %v409 = vunpack.c.l.b16 %v86
    %v410 = vunpack.c.h.b16 %v86
    %v411 = vunpack.c.l.b16 %v87
    %v412 = vunpack.c.h.b16 %v87
    %v413 = vunpack.c.l.b16 %v88
    %v414 = vunpack.c.h.b16 %v88
    %v415 = vunpack.c.l.b16 %v89
    %v416 = vunpack.c.h.b16 %v89
    %v417 = vunpack.c.l.b16 %v90
    %v418 = vunpack.c.h.b16 %v90
    %v419 = vunpack.c.l.b16 %v91
    %v420 = vunpack.c.h.b16 %v91
    %v421 = vunpack.c.l.b16 %v92
    %v422 = vunpack.c.h.b16 %v92
    %v423 = vunpack.c.l.b16 %v93
    %v424 = vunpack.c.h.b16 %v93
    %v425 = vunpack.c.l.b16 %v94
    %v426 = vunpack.c.h.b16 %v94
    %v427 = vunpack.c.l.b16 %v95
    %v428 = vunpack.c.h.b16 %v95
    %v429 = vunpack.c.l.b16 %v96
    %v430 = vunpack.c.h.b16 %v96
    %v431 = vunpack.c.l.b16 %v97
    %v432 = vunpack.c.h.b16 %v97
    %v433 = vunpack.c.l.b16 %v98
    %v434 = vunpack.c.h.b16 %v98
    %v435 = vunpack.c.l.b16 %v99
    %v436 = vunpack.c.h.b16 %v99
    %v437 = vunpack.c.l.b16 %v100
    %v438 = vunpack.c.h.b16 %v100
    %v439 = vunpack.c.l.b16 %v101
    %v440 = vunpack.c.h.b16 %v101
    %v441 = vunpack.c.l.b16 %v102
    %v442 = vunpack.c.h.b16 %v102
    %v443 = vunpack.c.l.b16 %v103
    %v444 = vunpack.c.h.b16 %v103
    %v445 = vunpack.c.l.b16 %v104
    %v446 = vunpack.c.h.b16 %v104
    %v447 = vunpack.c.l.b16 %v105
    %v448 = vunpack.c.h.b16 %v105
    %v449 = vunpack.c.l.b16 %v106
    %v450 = vunpack.c.h.b16 %v106
    %v451 = vunpack.c.l.b16 %v107
    %v452 = vunpack.c.h.b16 %v107
    %v453 = vunpack.c.l.b16 %v108
    %v454 = vunpack.c.h.b16 %v108
    %v455 = vunpack.c.l.b16 %v109
    %v456 = vunpack.c.h.b16 %v109
    %v457 = vunpack.c.l.b16 %v110
    %v458 = vunpack.c.h.b16 %v110
    %v459 = vunpack.c.l.b16 %v111
    %v460 = vunpack.c.h.b16 %v111
    %v461 = vunpack.c.l.b16 %v112
    %v462 = vunpack.c.h.b16 %v112
    %v463 = vunpack.c.l.b16 %v113
    %v464 = vunpack.c.h.b16 %v113
    %v465 = vunpack.c.l.b16 %v114
    %v466 = vunpack.c.h.b16 %v114
    %v467 = vunpack.c.l.b16 %v115
    %v468 = vunpack.c.h.b16 %v115
    %v469 = vunpack.c.l.b16 %v116
    %v470 = vunpack.c.h.b16 %v116
    %v471 = vunpack.c.l.b16 %v117
    %v472 = vunpack.c.h.b16 %v117
    %v473 = vunpack.c.l.b16 %v118
    %v474 = vunpack.c.h.b16 %v118
    %v475 = vunpack.c.l.b16 %v119
    %v476 = vunpack.c.h.b16 %v119
    %v477 = vunpack.c.l.b16 %v120
    %v478 = vunpack.c.h.b16 %v120
    %v479 = vunpack.c.l.b16 %v121
    %v480 = vunpack.c.h.b16 %v121
    %v481 = vunpack.c.l.b16 %v122
    %v482 = vunpack.c.h.b16 %v122
    %v483 = vunpack.c.l.b16 %v123
    %v484 = vunpack.c.h.b16 %v123
    %v485 = vunpack.c.l.b16 %v124
    %v486 = vunpack.c.h.b16 %v124
    %v487 = vunpack.c.l.b16 %v125
    %v488 = vunpack.c.h.b16 %v125
    %v489 = vunpack.c.l.b16 %v126
    %v490 = vunpack.c.h.b16 %v126
    %v491 = vunpack.c.l.b16 %v127
    %v492 = vunpack.c.h.b16 %v127
    %v493 = vunpack.c.l.b16 %v128
    %v494 = vunpack.c.h.b16 %v128
    %v495 = vunpack.c.l.b16 %v129
    %v496 = vunpack.c.h.b16 %v129
    %v497 = vunpack.c.l.b16 %v130
    %v498 = vunpack.c.h.b16 %v130
    %v499 = vunpack.c.l.b16 %v131
    %v500 = vunpack.c.h.b16 %v131
    %v501 = vunpack.c.l.b16 %v132
    %v502 = vunpack.c.h.b16 %v132
    %v503 = vunpack.c.l.b16 %v133
    %v504 = vunpack.c.h.b16 %v133
    %v505 = vunpack.c.l.b16 %v134
    %v506 = vunpack.c.h.b16 %v134
    %v507 = vunpack.c.l.b16 %v135
    %v508 = vunpack.c.h.b16 %v135
    %v509 = vunpack.c.l.b16 %v136
    %v510 = vunpack.c.h.b16 %v136
    %v511 = vunpack.c.l.b16 %v137
    %v512 = vunpack.c.h.b16 %v137
    %v513 = vunpack.c.l.b16 %v138
    %v514 = vunpack.c.h.b16 %v138
    %v515 = vunpack.c.l.b16 %v139
    %v516 = vunpack.c.h.b16 %v139
    %v517 = vunpack.c.l.b16 %v140
    %v518 = vunpack.c.h.b16 %v140
    %v519 = vunpack.c.l.b16 %v141
    %v520 = vunpack.c.h.b16 %v141
    %v521 = vunpack.c.l.b16 %v142
    %v522 = vunpack.c.h.b16 %v142
    %v523 = vunpack.c.l.b16 %v143
    %v524 = vunpack.c.h.b16 %v143
    %v525 = vunpack.c.l.b16 %v144
    %v526 = vunpack.c.h.b16 %v144
    %v527 = vunpack.c.l.b16 %v145
    %v528 = vunpack.c.h.b16 %v145
    %v529 = vunpack.c.l.b16 %v146
    %v530 = vunpack.c.h.b16 %v146
    %v531 = vunpack.c.l.b16 %v147
    %v532 = vunpack.c.h.b16 %v147
    %v533 = vunpack.c.l.b16 %v148
    %v534 = vunpack.c.h.b16 %v148
    %v535 = vunpack.c.l.b16 %v149
    %v536 = vunpack.c.h.b16 %v149
    %v537 = vunpack.c.l.b16 %v150
    %v538 = vunpack.c.h.b16 %v150
    %v539 = vunpack.c.l.b16 %v151
    %v540 = vunpack.c.h.b16 %v151
    %v541 = vunpack.c.l.b16 %v152
    %v542 = vunpack.c.h.b16 %v152
    %v543 = vunpack.c.l.b16 %v153
    %v544 = vunpack.c.h.b16 %v153
    %v545 = vunpack.c.l.b16 %v154
    %v546 = vunpack.c.h.b16 %v154
    %v547 = vunpack.c.l.b16 %v155
    %v548 = vunpack.c.h.b16 %v155
    %v549 = vunpack.c.l.b16 %v156
    %v550 = vunpack.c.h.b16 %v156
    %v551 = vunpack.c.l.b16 %v157
    %v552 = vunpack.c.h.b16 %v157
    %v553 = vunpack.c.l.b16 %v158
    %v554 = vunpack.c.h.b16 %v158
    %v555 = vunpack.c.l.b16 %v159
    %v556 = vunpack.c.h.b16 %v159
    %v557 = vunpack.c.l.b16 %v160
    %v558 = vunpack.c.h.b16 %v160
    %v559 = vunpack.c.l.b16 %v161
    %v560 = vunpack.c.h.b16 %v161
    %v561 = vunpack.c.l.b16 %v162
    %v562 = vunpack.c.h.b16 %v162
    %v563 = vunpack.c.l.b16 %v163
    %v564 = vunpack.c.h.b16 %v163
    %v565 = vunpack.c.l.b16 %v164
    %v566 = vunpack.c.h.b16 %v164
    %v567 = vunpack.c.l.b16 %v165
    %v568 = vunpack.c.h.b16 %v165
    %v569 = vunpack.c.l.b16 %v166
    %v570 = vunpack.c.h.b16 %v166
    %v571 = vunpack.c.l.b16 %v167
    %v572 = vunpack.c.h.b16 %v167
    %v573 = vunpack.c.l.b16 %v168
    %v574 = vunpack.c.h.b16 %v168
    %v575 = vunpack.c.l.b16 %v169
    %v576 = vunpack.c.h.b16 %v169
    %v577 = vunpack.c.l.b16 %v170
    %v578 = vunpack.c.h.b16 %v170
    %v579 = vunpack.c.l.b16 %v171
    %v580 = vunpack.c.h.b16 %v171
    %v581 = vunpack.c.l.b16 %v172
    %v582 = vunpack.c.h.b16 %v172
    %v583 = vunpack.c.l.b16 %v173
    %v584 = vunpack.c.h.b16 %v173
    %v585 = vunpack.c.l.b16 %v174
    %v586 = vunpack.c.h.b16 %v174
    %v587 = vpack.c.b16 %v333, %v331
    %v588 = vpack.c.b16 %v334, %v332
    %v589 = vpack.c.b16 %v337, %v335
    %v590 = vpack.c.b16 %v338, %v336
    %v591 = vpack.c.b16 %v341, %v339
    %v592 = vpack.c.b16 %v342, %v340
    %v593 = vpack.c.b16 %v345, %v343
    %v594 = vpack.c.b16 %v346, %v344
    %v595 = vpack.c.b16 %v349, %v347
    %v596 = vpack.c.b16 %v350, %v348
    %v597 = vpack.c.b16 %v353, %v351
    %v598 = vpack.c.b16 %v354, %v352
    %v599 = vpack.c.b16 %v357, %v355
    %v600 = vpack.c.b16 %v358, %v356
    %v601 = vpack.c.b16 %v361, %v359
    %v602 = vpack.c.b16 %v362, %v360
    %v603 = vpack.c.b16 %v365, %v363
    %v604 = vpack.c.b16 %v366, %v364
    %v605 = vpack.c.b16 %v369, %v367
    %v606 = vpack.c.b16 %v370, %v368
    %v607 = vpack.c.b16 %v373, %v371
    %v608 = vpack.c.b16 %v374, %v372
    %v609 = vpack.c.b16 %v377, %v375
    %v610 = vpack.c.b16 %v378, %v376
    %v611 = vpack.c.b16 %v381, %v379
    %v612 = vpack.c.b16 %v382, %v380
    %v613 = vpack.c.b16 %v385, %v383
    %v614 = vpack.c.b16 %v386, %v384
    %v615 = vpack.c.b16 %v389, %v387
    %v616 = vpack.c.b16 %v390, %v388
    %v617 = vpack.c.b16 %v393, %v391
    %v618 = vpack.c.b16 %v394, %v392
    %v619 = vpack.c.b16 %v397, %v395
    %v620 = vpack.c.b16 %v398, %v396
    %v621 = vpack.c.b16 %v401, %v399
    %v622 = vpack.c.b16 %v402, %v400
    %v623 = vpack.c.b16 %v405, %v403
    %v624 = vpack.c.b16 %v406, %v404
    %v625 = vpack.c.b16 %v409, %v407
    %v626 = vpack.c.b16 %v410, %v408
    %v627 = vpack.c.b16 %v413, %v411
    %v628 = vpack.c.b16 %v414, %v412
    %v629 = vpack.c.b16 %v417, %v415
    %v630 = vpack.c.b16 %v418, %v416
    %v631 = vpack.c.b16 %v421, %v419
    %v632 = vpack.c.b16 %v422, %v420
    %v633 = vpack.c.b16 %v425, %v423
    %v634 = vpack.c.b16 %v426, %v424
    %v635 = vpack.c.b16 %v429, %v427
    %v636 = vpack.c.b16 %v430, %v428
    %v637 = vpack.c.b16 %v433, %v431
    %v638 = vpack.c.b16 %v434, %v432
    %v639 = vpack.c.b16 %v437, %v435
    %v640 = vpack.c.b16 %v438, %v436
    %v641 = vpack.c.b16 %v441, %v439
    %v642 = vpack.c.b16 %v442, %v440
    %v643 = vpack.c.b16 %v445, %v443
    %v644 = vpack.c.b16 %v446, %v444
    %v645 = vpack.c.b16 %v449, %v447
    %v646 = vpack.c.b16 %v450, %v448
    %v647 = vpack.c.b16 %v453, %v451
    %v648 = vpack.c.b16 %v454, %v452
    %v649 = vpack.c.b16 %v457, %v455
    %v650 = vpack.c.b16 %v458, %v456
    %v651 = vpack.c.b16 %v461, %v459
    %v652 = vpack.c.b16 %v462, %v460
    %v653 = vpack.c.b16 %v465, %v463
    %v654 = vpack.c.b16 %v466, %v464
    %v655 = vpack.c.b16 %v469, %v467
    %v656 = vpack.c.b16 %v470, %v468
    %v657 = vpack.c.b16 %v473, %v471
    %v658 = vpack.c.b16 %v474, %v472
    %v659 = vpack.c.b16 %v477, %v475
    %v660 = vpack.c.b16 %v478, %v476
    %v661 = vpack.c.b16 %v481, %v479
    %v662 = vpack.c.b16 %v482, %v480
    %v663 = vpack.c.b16 %v485, %v483
    %v664 = vpack.c.b16 %v486, %v484
    %v665 = vpack.c.b16 %v489, %v487
    %v666 = vpack.c.b16 %v490, %v488
    %v667 = vpack.c.b16 %v493, %v491
    %v668 = vpack.c.b16 %v494, %v492
    %v669 = vpack.c.b16 %v497, %v495
    %v670 = vpack.c.b16 %v498, %v496
    %v671 = vpack.c.b16 %v501, %v499
    %v672 = vpack.c.b16 %v502, %v500
    %v673 = vpack.c.b16 %v505, %v503
    %v674 = vpack.c.b16 %v506, %v504
    %v675 = vpack.c.b16 %v509, %v507
    %v676 = vpack.c.b16 %v510, %v508
    %v677 = vpack.c.b16 %v513, %v511
    %v678 = vpack.c.b16 %v514, %v512
    %v679 = vpack.c.b16 %v517, %v515
    %v680 = vpack.c.b16 %v518, %v516
    %v681 = vpack.c.b16 %v521, %v519
    %v682 = vpack.c.b16 %v522, %v520
    %v683 = vpack.c.b16 %v525, %v523
    %v684 = vpack.c.b16 %v526, %v524
    %v685 = vpack.c.b16 %v529, %v527
    %v686 = vpack.c.b16 %v530, %v528
    %v687 = vpack.c.b16 %v533, %v531
    %v688 = vpack.c.b16 %v534, %v532
    %v689 = vpack.c.b16 %v537, %v535
    %v690 = vpack.c.b16 %v538, %v536
    %v691 = vpack.c.b16 %v541, %v539
    %v692 = vpack.c.b16 %v542, %v540
    %v693 = vpack.c.b16 %v545, %v543
    %v694 = vpack.c.b16 %v546, %v544
    %v695 = vpack.c.b16 %v549, %v547
    %v696 = vpack.c.b16 %v550, %v548
    %v697 = vpack.c.b16 %v553, %v551
    %v698 = vpack.c.b16 %v554, %v552
    %v699 = vpack.c.b16 %v557, %v555
    %v700 = vpack.c.b16 %v558, %v556
    %v701 = vpack.c.b16 %v561, %v559
    %v702 = vpack.c.b16 %v562, %v560
    %v703 = vpack.c.b16 %v565, %v563
    %v704 = vpack.c.b16 %v566, %v564
    %v705 = vpack.c.b16 %v569, %v567
    %v706 = vpack.c.b16 %v570, %v568
    %v707 = vpack.c.b16 %v573, %v571
    %v708 = vpack.c.b16 %v574, %v572
    %v709 = vpack.c.b16 %v577, %v575
    %v710 = vpack.c.b16 %v578, %v576
    %v711 = vpack.c.b16 %v581, %v579
    %v712 = vpack.c.b16 %v582, %v580
    %v713 = vpack.c.b16 %v585, %v583
    %v714 = vpack.c.b16 %v586, %v584
    %843 = vmatprep.subr.bf16.mxu0 %v588
    %844 = vmatpush1.bf16.msra.mxu0 %v587
    %845 = vmatprep.subr.bf16.mxu0 %v590
    %846 = vmatpush1.bf16.msra.mxu0 %v589
    %847 = vmatprep.subr.bf16.mxu0 %v592
    %848 = vmatpush1.bf16.msra.mxu0 %v591
    %849 = vmatprep.subr.bf16.mxu0 %v594
    %850 = vmatpush1.bf16.msra.mxu0 %v593
    %851 = vmatprep.subr.bf16.mxu0 %v596
    %852 = vmatpush1.bf16.msra.mxu0 %v595
    %853 = vmatprep.subr.bf16.mxu0 %v598
    %854 = vmatpush1.bf16.msra.mxu0 %v597
    %855 = vmatprep.subr.bf16.mxu0 %v600
    %856 = vmatpush1.bf16.msra.mxu0 %v599
    %857 = vmatprep.subr.bf16.mxu0 %v602
    %858 = vmatpush1.bf16.msra.mxu0 %v601
    %859 = vmatprep.subr.bf16.mxu0 %v604
    %860 = vmatpush1.bf16.msra.mxu0 %v603
    %861 = vmatprep.subr.bf16.mxu0 %v606
    %862 = vmatpush1.bf16.msra.mxu0 %v605
    %863 = vmatprep.subr.bf16.mxu0 %v608
    %864 = vmatpush1.bf16.msra.mxu0 %v607
    %865 = vmatprep.subr.bf16.mxu0 %v610
    %866 = vmatpush1.bf16.msra.mxu0 %v609
    %867 = vmatprep.subr.bf16.mxu0 %v612
    %868 = vmatpush1.bf16.msra.mxu0 %v611
    %869 = vmatprep.subr.bf16.mxu0 %v614
    %870 = vmatpush1.bf16.msra.mxu0 %v613
    %871 = vmatprep.subr.bf16.mxu0 %v616
    %872 = vmatpush1.bf16.msra.mxu0 %v615
    %873 = vmatprep.subr.bf16.mxu0 %v618
    %874 = vmatpush1.bf16.msra.mxu0 %v617
    %875 = vmatprep.mubr.bf16.mxu0 %v188
    %876 = vmatmul.mubr.bf16.gmra.mrb[0].mxu0 %v187
    %v877 = vpop.f32.mrb[0].mxu0
    %v878 = vadd.f32 0.0, %v877
    %v879 = vpop.f32.mrb[0].mxu0
    %v880 = vadd.f32 0.0, %v879
    %v881 = vpop.f32.mrb[0].mxu0
    %v882 = vpop.f32.mrb[0].mxu0
    %883 = vdwg.mxu0
    %884 = vmatprep.subr.bf16.mxu0 %v620
    %885 = vmatpush1.bf16.msra.mxu0 %v619
    %886 = vmatprep.subr.bf16.mxu0 %v622
    %887 = vmatpush1.bf16.msra.mxu0 %v621
    %888 = vmatprep.subr.bf16.mxu0 %v624
    %889 = vmatpush1.bf16.msra.mxu0 %v623
    %890 = vmatprep.subr.bf16.mxu0 %v626
    %891 = vmatpush1.bf16.msra.mxu0 %v625
    %892 = vmatprep.subr.bf16.mxu0 %v628
    %893 = vmatpush1.bf16.msra.mxu0 %v627
    %894 = vmatprep.subr.bf16.mxu0 %v630
    %895 = vmatpush1.bf16.msra.mxu0 %v629
    %896 = vmatprep.subr.bf16.mxu0 %v632
    %897 = vmatpush1.bf16.msra.mxu0 %v631
    %898 = vmatprep.subr.bf16.mxu0 %v634
    %899 = vmatpush1.bf16.msra.mxu0 %v633
    %900 = vmatprep.subr.bf16.mxu0 %v636
    %901 = vmatpush1.bf16.msra.mxu0 %v635
    %902 = vmatprep.subr.bf16.mxu0 %v638
    %903 = vmatpush1.bf16.msra.mxu0 %v637
    %904 = vmatprep.subr.bf16.mxu0 %v640
    %905 = vmatpush1.bf16.msra.mxu0 %v639
    %906 = vmatprep.subr.bf16.mxu0 %v642
    %907 = vmatpush1.bf16.msra.mxu0 %v641
    %908 = vmatprep.subr.bf16.mxu0 %v644
    %909 = vmatpush1.bf16.msra.mxu0 %v643
    %910 = vmatprep.subr.bf16.mxu0 %v646
    %911 = vmatpush1.bf16.msra.mxu0 %v645
    %912 = vmatprep.subr.bf16.mxu0 %v648
    %913 = vmatpush1.bf16.msra.mxu0 %v647
    %914 = vmatprep.subr.bf16.mxu0 %v650
    %915 = vmatpush1.bf16.msra.mxu0 %v649
    %916 = vmatprep.mubr.bf16.mxu0 %v190
    %917 = vmatmul.mubr.bf16.gmra.mrb[0].mxu0 %v189
    %v918 = vpop.f32.mrb[0].mxu0
    %v919 = vadd.f32 %v878, %v918
    %v920 = vpop.f32.mrb[0].mxu0
    %v921 = vadd.f32 %v880, %v920
    %v922 = vpop.f32.mrb[0].mxu0
    %v923 = vpop.f32.mrb[0].mxu0
    %924 = vdwg.mxu0
    %925 = vmatprep.subr.bf16.mxu0 %v652
    %926 = vmatpush1.bf16.msra.mxu0 %v651
    %927 = vmatprep.subr.bf16.mxu0 %v654
    %928 = vmatpush1.bf16.msra.mxu0 %v653
    %929 = vmatprep.subr.bf16.mxu0 %v656
    %930 = vmatpush1.bf16.msra.mxu0 %v655
    %931 = vmatprep.subr.bf16.mxu0 %v658
    %932 = vmatpush1.bf16.msra.mxu0 %v657
    %933 = vmatprep.subr.bf16.mxu0 %v660
    %934 = vmatpush1.bf16.msra.mxu0 %v659
    %935 = vmatprep.subr.bf16.mxu0 %v662
    %936 = vmatpush1.bf16.msra.mxu0 %v661
    %937 = vmatprep.subr.bf16.mxu0 %v664
    %938 = vmatpush1.bf16.msra.mxu0 %v663
    %939 = vmatprep.subr.bf16.mxu0 %v666
    %940 = vmatpush1.bf16.msra.mxu0 %v665
    %941 = vmatprep.subr.bf16.mxu0 %v668
    %942 = vmatpush1.bf16.msra.mxu0 %v667
    %943 = vmatprep.subr.bf16.mxu0 %v670
    %944 = vmatpush1.bf16.msra.mxu0 %v669
    %945 = vmatprep.subr.bf16.mxu0 %v672
    %946 = vmatpush1.bf16.msra.mxu0 %v671
    %947 = vmatprep.subr.bf16.mxu0 %v674
    %948 = vmatpush1.bf16.msra.mxu0 %v673
    %949 = vmatprep.subr.bf16.mxu0 %v676
    %950 = vmatpush1.bf16.msra.mxu0 %v675
    %951 = vmatprep.subr.bf16.mxu0 %v678
    %952 = vmatpush1.bf16.msra.mxu0 %v677
    %953 = vmatprep.subr.bf16.mxu0 %v680
    %954 = vmatpush1.bf16.msra.mxu0 %v679
    %955 = vmatprep.subr.bf16.mxu0 %v682
    %956 = vmatpush1.bf16.msra.mxu0 %v681
    %957 = vmatprep.mubr.bf16.mxu0 %v192
    %958 = vmatmul.mubr.bf16.gmra.mrb[0].mxu0 %v191
    %v959 = vpop.f32.mrb[0].mxu0
    %v960 = vadd.f32 %v919, %v959
    %v961 = vpop.f32.mrb[0].mxu0
    %v962 = vadd.f32 %v921, %v961
    %v963 = vpop.f32.mrb[0].mxu0
    %v964 = vpop.f32.mrb[0].mxu0
    %965 = vdwg.mxu0
    %966 = vmatprep.subr.bf16.mxu0 %v684
    %967 = vmatpush1.bf16.msra.mxu0 %v683
    %968 = vmatprep.subr.bf16.mxu0 %v686
    %969 = vmatpush1.bf16.msra.mxu0 %v685
    %970 = vmatprep.subr.bf16.mxu0 %v688
    %971 = vmatpush1.bf16.msra.mxu0 %v687
    %972 = vmatprep.subr.bf16.mxu0 %v690
    %973 = vmatpush1.bf16.msra.mxu0 %v689
    %974 = vmatprep.subr.bf16.mxu0 %v692
    %975 = vmatpush1.bf16.msra.mxu0 %v691
    %976 = vmatprep.subr.bf16.mxu0 %v694
    %977 = vmatpush1.bf16.msra.mxu0 %v693
    %978 = vmatprep.subr.bf16.mxu0 %v696
    %979 = vmatpush1.bf16.msra.mxu0 %v695
    %980 = vmatprep.subr.bf16.mxu0 %v698
    %981 = vmatpush1.bf16.msra.mxu0 %v697
    %982 = vmatprep.subr.bf16.mxu0 %v700
    %983 = vmatpush1.bf16.msra.mxu0 %v699
    %984 = vmatprep.subr.bf16.mxu0 %v702
    %985 = vmatpush1.bf16.msra.mxu0 %v701
    %986 = vmatprep.subr.bf16.mxu0 %v704
    %987 = vmatpush1.bf16.msra.mxu0 %v703
    %988 = vmatprep.subr.bf16.mxu0 %v706
    %989 = vmatpush1.bf16.msra.mxu0 %v705
    %990 = vmatprep.subr.bf16.mxu0 %v708
    %991 = vmatpush1.bf16.msra.mxu0 %v707
    %992 = vmatprep.subr.bf16.mxu0 %v710
    %993 = vmatpush1.bf16.msra.mxu0 %v709
    %994 = vmatprep.subr.bf16.mxu0 %v712
    %995 = vmatpush1.bf16.msra.mxu0 %v711
    %996 = vmatprep.subr.bf16.mxu0 %v714
    %997 = vmatpush1.bf16.msra.mxu0 %v713
    %998 = vmatprep.mubr.bf16.mxu0 %v194
    %999 = vmatmul.mubr.bf16.gmra.mrb[0].mxu0 %v193
    %v1000 = vpop.f32.mrb[0].mxu0
    %v1001 = vadd.f32 %v960, %v1000
    %v1002 = vpop.f32.mrb[0].mxu0
    %v1003 = vadd.f32 %v962, %v1002
    %v1004 = vpop.f32.mrb[0].mxu0
    %v1005 = vpop.f32.mrb[0].mxu0
    %1006 = vdwg.mxu0
    %v1007 = vld [vmem:[%s2] sm:$0x3]
    %v1009 = vlaneseq
    %v1010 = vshrl.u32 %v1009, 7
    %v1011 = vsub.s32 0, %v1010
    %v1012 = vrot.slane %v1007, %v1011
    %v1013 = vlaneseq
    %v1014 = vshrl.u32 %v1013, 7
    %v1015 = vsub.s32 1, %v1014
    %v1016 = vrot.slane %v1007, %v1015
    %v1019 = vmul.f32 %v1001, %v1012
    %v1020 = vmul.f32 %v1003, %v1016
    %v1021 = vld [vmem:[%s3] sm:$0x3]
    %v1023 = vlaneseq
    %v1024 = vshrl.u32 %v1023, 7
    %v1025 = vsub.s32 0, %v1024
    %v1026 = vrot.slane %v1021, %v1025
    %v1027 = vlaneseq
    %v1028 = vshrl.u32 %v1027, 7
    %v1029 = vsub.s32 1, %v1028
    %v1030 = vrot.slane %v1021, %v1029
    %v1033 = vadd.f32 %v1019, %v1026
    %v1034 = vadd.f32 %v1020, %v1030
    %v1035 = vmax.f32 %v1033, 0.0
    %v1036 = vmax.f32 %v1034, 0.0
    %v1037 = vpack.c.bf16 %v1035, %v1035
    %v1038 = vpack.c.bf16 %v1036, %v1036
    %v1039 = vld [vmem:[%s4] sm:$0xf]
    %v1040 = vld [vmem:[%s4 + $0x4] sm:$0xf]
    %v1041 = vld [vmem:[%s4 + $0x8] sm:$0xf]
    %v1042 = vld [vmem:[%s4 + $0xc] sm:$0xf]
    %v1043 = vld [vmem:[%s4 + $0x10] sm:$0xf]
    %v1044 = vld [vmem:[%s4 + $0x14] sm:$0xf]
    %v1045 = vld [vmem:[%s4 + $0x18] sm:$0xf]
    %v1046 = vld [vmem:[%s4 + $0x1c] sm:$0xf]
    %v1047 = vld [vmem:[%s4 + $0x20] sm:$0xf]
    %v1048 = vld [vmem:[%s4 + $0x24] sm:$0xf]
    %v1049 = vld [vmem:[%s4 + $0x28] sm:$0xf]
    %v1050 = vld [vmem:[%s4 + $0x2c] sm:$0xf]
    %v1051 = vld [vmem:[%s4 + $0x30] sm:$0xf]
    %v1052 = vld [vmem:[%s4 + $0x34] sm:$0xf]
    %v1053 = vld [vmem:[%s4 + $0x38] sm:$0xf]
    %v1054 = vld [vmem:[%s4 + $0x3c] sm:$0xf]
    %v1055 = vld [vmem:[%s4 + $0x40] sm:$0xf]
    %v1056 = vld [vmem:[%s4 + $0x44] sm:$0xf]
    %v1057 = vld [vmem:[%s4 + $0x48] sm:$0xf]
    %v1058 = vld [vmem:[%s4 + $0x4c] sm:$0xf]
    %v1059 = vld [vmem:[%s4 + $0x50] sm:$0xf]
    %v1060 = vld [vmem:[%s4 + $0x54] sm:$0xf]
    %v1061 = vld [vmem:[%s4 + $0x58] sm:$0xf]
    %v1062 = vld [vmem:[%s4 + $0x5c] sm:$0xf]
    %v1063 = vld [vmem:[%s4 + $0x60] sm:$0xf]
    %v1064 = vld [vmem:[%s4 + $0x64] sm:$0xf]
    %v1065 = vld [vmem:[%s4 + $0x68] sm:$0xf]
    %v1066 = vld [vmem:[%s4 + $0x6c] sm:$0xf]
    %v1067 = vld [vmem:[%s4 + $0x70] sm:$0xf]
    %v1068 = vld [vmem:[%s4 + $0x74] sm:$0xf]
    %v1069 = vld [vmem:[%s4 + $0x78] sm:$0xf]
    %v1070 = vld [vmem:[%s4 + $0x7c] sm:$0xf]
    %v1103 = vunpack.c.l.b16 %v1039
    %v1104 = vunpack.c.l.b16 %v1040
    %v1105 = vunpack.c.l.b16 %v1041
    %v1106 = vunpack.c.l.b16 %v1042
    %v1107 = vunpack.c.l.b16 %v1043
    %v1108 = vunpack.c.l.b16 %v1044
    %v1109 = vunpack.c.l.b16 %v1045
    %v1110 = vunpack.c.l.b16 %v1046
    %v1111 = vunpack.c.l.b16 %v1047
    %v1112 = vunpack.c.l.b16 %v1048
    %v1113 = vunpack.c.l.b16 %v1049
    %v1114 = vunpack.c.l.b16 %v1050
    %v1115 = vunpack.c.l.b16 %v1051
    %v1116 = vunpack.c.l.b16 %v1052
    %v1117 = vunpack.c.l.b16 %v1053
    %v1118 = vunpack.c.l.b16 %v1054
    %v1119 = vunpack.c.l.b16 %v1055
    %v1120 = vunpack.c.l.b16 %v1056
    %v1121 = vunpack.c.l.b16 %v1057
    %v1122 = vunpack.c.l.b16 %v1058
    %v1123 = vunpack.c.l.b16 %v1059
    %v1124 = vunpack.c.l.b16 %v1060
    %v1125 = vunpack.c.l.b16 %v1061
    %v1126 = vunpack.c.l.b16 %v1062
    %v1127 = vunpack.c.l.b16 %v1063
    %v1128 = vunpack.c.l.b16 %v1064
    %v1129 = vunpack.c.l.b16 %v1065
    %v1130 = vunpack.c.l.b16 %v1066
    %v1131 = vunpack.c.l.b16 %v1067
    %v1132 = vunpack.c.l.b16 %v1068
    %v1133 = vunpack.c.l.b16 %v1069
    %v1134 = vunpack.c.l.b16 %v1070
    %v1135 = vpack.c.b16 %v1104, %v1103
    %v1136 = vpack.c.b16 %v1106, %v1105
    %v1137 = vpack.c.b16 %v1108, %v1107
    %v1138 = vpack.c.b16 %v1110, %v1109
    %v1139 = vpack.c.b16 %v1112, %v1111
    %v1140 = vpack.c.b16 %v1114, %v1113
    %v1141 = vpack.c.b16 %v1116, %v1115
    %v1142 = vpack.c.b16 %v1118, %v1117
    %v1143 = vpack.c.b16 %v1120, %v1119
    %v1144 = vpack.c.b16 %v1122, %v1121
    %v1145 = vpack.c.b16 %v1124, %v1123
    %v1146 = vpack.c.b16 %v1126, %v1125
    %v1147 = vpack.c.b16 %v1128, %v1127
    %v1148 = vpack.c.b16 %v1130, %v1129
    %v1149 = vpack.c.b16 %v1132, %v1131
    %v1150 = vpack.c.b16 %v1134, %v1133
    %1167 = vmatprep.subr.bf16.mxu0 0
    %1168 = vmatpush1.bf16.msra.mxu0 %v1135
    %1169 = vmatprep.subr.bf16.mxu0 0
    %1170 = vmatpush1.bf16.msra.mxu0 %v1136
    %1171 = vmatprep.subr.bf16.mxu0 0
    %1172 = vmatpush1.bf16.msra.mxu0 %v1137
    %1173 = vmatprep.subr.bf16.mxu0 0
    %1174 = vmatpush1.bf16.msra.mxu0 %v1138
    %1175 = vmatprep.subr.bf16.mxu0 0
    %1176 = vmatpush1.bf16.msra.mxu0 %v1139
    %1177 = vmatprep.subr.bf16.mxu0 0
    %1178 = vmatpush1.bf16.msra.mxu0 %v1140
    %1179 = vmatprep.subr.bf16.mxu0 0
    %1180 = vmatpush1.bf16.msra.mxu0 %v1141
    %1181 = vmatprep.subr.bf16.mxu0 0
    %1182 = vmatpush1.bf16.msra.mxu0 %v1142
    %1183 = vmatprep.subr.bf16.mxu0 0
    %1184 = vmatpush1.bf16.msra.mxu0 %v1143
    %1185 = vmatprep.subr.bf16.mxu0 0
    %1186 = vmatpush1.bf16.msra.mxu0 %v1144
    %1187 = vmatprep.subr.bf16.mxu0 0
    %1188 = vmatpush1.bf16.msra.mxu0 %v1145
    %1189 = vmatprep.subr.bf16.mxu0 0
    %1190 = vmatpush1.bf16.msra.mxu0 %v1146
    %1191 = vmatprep.subr.bf16.mxu0 0
    %1192 = vmatpush1.bf16.msra.mxu0 %v1147
    %1193 = vmatprep.subr.bf16.mxu0 0
    %1194 = vmatpush1.bf16.msra.mxu0 %v1148
    %1195 = vmatprep.subr.bf16.mxu0 0
    %1196 = vmatpush1.bf16.msra.mxu0 %v1149
    %1197 = vmatprep.subr.bf16.mxu0 0
    %1198 = vmatpush1.bf16.msra.mxu0 %v1150
    %1199 = vmatprep.mubr.bf16.mxu0 %v1038
    %1200 = vmatmul.mubr.bf16.gmra.mrb[0].mxu0 %v1037
    %v1201 = vpop.f32.mrb[0].mxu0
    %v1202 = vadd.f32 0.0, %v1201
    %v1203 = vpop.f32.mrb[0].mxu0
    %v1204 = vpop.f32.mrb[0].mxu0
    %v1205 = vpop.f32.mrb[0].mxu0
    %1206 = vdwg.mxu0
    %v1207 = vld [vmem:[%s5] sm:$0x1]
    %v1209 = vlaneseq
    %v1210 = vshrl.u32 %v1209, 7
    %v1211 = vsub.s32 0, %v1210
    %v1212 = vrot.slane %v1207, %v1211
    %v1214 = vmul.f32 %v1202, %v1212
    %v1215 = vld [vmem:[%s6] sm:$0x1]
    %v1217 = vlaneseq
    %v1218 = vshrl.u32 %v1217, 7
    %v1219 = vsub.s32 0, %v1218
    %v1220 = vrot.slane %v1215, %v1219
    %v1222 = vadd.f32 %v1214, %v1220
    %v1223 = vmax.f32 %v1222, 0.0
    %v1224 = vpack.c.bf16 %v1223, %v1223
    %v1225 = vld [vmem:[%s7] sm:$0xf]
    %v1226 = vld [vmem:[%s7 + $0x4] sm:$0xf]
    %v1227 = vld [vmem:[%s7 + $0x8] sm:$0xf]
    %v1228 = vld [vmem:[%s7 + $0xc] sm:$0xf]
    %v1229 = vld [vmem:[%s7 + $0x10] sm:$0xf]
    %v1230 = vld [vmem:[%s7 + $0x14] sm:$0xf]
    %v1231 = vld [vmem:[%s7 + $0x18] sm:$0xf]
    %v1232 = vld [vmem:[%s7 + $0x1c] sm:$0xf]
    %v1233 = vld [vmem:[%s7 + $0x20] sm:$0xf]
    %v1234 = vld [vmem:[%s7 + $0x24] sm:$0xf]
    %v1235 = vld [vmem:[%s7 + $0x28] sm:$0xf]
    %v1236 = vld [vmem:[%s7 + $0x2c] sm:$0xf]
    %v1237 = vld [vmem:[%s7 + $0x30] sm:$0xf]
    %v1238 = vld [vmem:[%s7 + $0x34] sm:$0xf]
    %v1239 = vld [vmem:[%s7 + $0x38] sm:$0xf]
    %v1240 = vld [vmem:[%s7 + $0x3c] sm:$0xf]
    %v1257 = vunpack.c.l.b16 %v1225
    %v1258 = vunpack.c.l.b16 %v1226
    %v1259 = vunpack.c.l.b16 %v1227
    %v1260 = vunpack.c.l.b16 %v1228
    %v1261 = vunpack.c.l.b16 %v1229
    %v1262 = vunpack.c.l.b16 %v1230
    %v1263 = vunpack.c.l.b16 %v1231
    %v1264 = vunpack.c.l.b16 %v1232
    %v1265 = vunpack.c.l.b16 %v1233
    %v1266 = vunpack.c.l.b16 %v1234
    %v1267 = vunpack.c.l.b16 %v1235
    %v1268 = vunpack.c.l.b16 %v1236
    %v1269 = vunpack.c.l.b16 %v1237
    %v1270 = vunpack.c.l.b16 %v1238
    %v1271 = vunpack.c.l.b16 %v1239
    %v1272 = vunpack.c.l.b16 %v1240
    %v1273 = vpack.c.b16 %v1258, %v1257
    %v1274 = vpack.c.b16 %v1260, %v1259
    %v1275 = vpack.c.b16 %v1262, %v1261
    %v1276 = vpack.c.b16 %v1264, %v1263
    %v1277 = vpack.c.b16 %v1266, %v1265
    %v1278 = vpack.c.b16 %v1268, %v1267
    %v1279 = vpack.c.b16 %v1270, %v1269
    %v1280 = vpack.c.b16 %v1272, %v1271
    %1289 = vmatprep.subr.bf16.mxu0 0
    %1290 = vmatpush1.bf16.msra.mxu0 %v1273
    %1291 = vmatprep.subr.bf16.mxu0 0
    %1292 = vmatpush1.bf16.msra.mxu0 %v1274
    %1293 = vmatprep.subr.bf16.mxu0 0
    %1294 = vmatpush1.bf16.msra.mxu0 %v1275
    %1295 = vmatprep.subr.bf16.mxu0 0
    %1296 = vmatpush1.bf16.msra.mxu0 %v1276
    %1297 = vmatprep.subr.bf16.mxu0 0
    %1298 = vmatpush1.bf16.msra.mxu0 %v1277
    %1299 = vmatprep.subr.bf16.mxu0 0
    %1300 = vmatpush1.bf16.msra.mxu0 %v1278
    %1301 = vmatprep.subr.bf16.mxu0 0
    %1302 = vmatpush1.bf16.msra.mxu0 %v1279
    %1303 = vmatprep.subr.bf16.mxu0 0
    %1304 = vmatpush1.bf16.msra.mxu0 %v1280
    %1305 = vmatprep.subr.bf16.mxu0 0
    %1306 = vmatpush1.bf16.msra.mxu0 0
    %1307 = vmatprep.subr.bf16.mxu0 0
    %1308 = vmatpush1.bf16.msra.mxu0 0
    %1309 = vmatprep.subr.bf16.mxu0 0
    %1310 = vmatpush1.bf16.msra.mxu0 0
    %1311 = vmatprep.subr.bf16.mxu0 0
    %1312 = vmatpush1.bf16.msra.mxu0 0
    %1313 = vmatprep.subr.bf16.mxu0 0
    %1314 = vmatpush1.bf16.msra.mxu0 0
    %1315 = vmatprep.subr.bf16.mxu0 0
    %1316 = vmatpush1.bf16.msra.mxu0 0
    %1317 = vmatprep.subr.bf16.mxu0 0
    %1318 = vmatpush1.bf16.msra.mxu0 0
    %1319 = vmatprep.subr.bf16.mxu0 0
    %1320 = vmatpush1.bf16.msra.mxu0 0
    %1321 = vmatprep.mubr.bf16.mxu0 0
    %1322 = vmatmul.mubr.bf16.gmra.mrb[0].mxu0 %v1224
    %v1323 = vpop.f32.mrb[0].mxu0
    %v1324 = vadd.f32 0.0, %v1323
    %v1325 = vpop.f32.mrb[0].mxu0
    %v1326 = vpop.f32.mrb[0].mxu0
    %v1327 = vpop.f32.mrb[0].mxu0
    %1328 = vdwg.mxu0
    %v1329 = vld [vmem:[%s8] sm:$0x1]
    %v1331 = vlaneseq
    %v1332 = vshrl.u32 %v1331, 7
    %v1333 = vsub.s32 0, %v1332
    %v1334 = vrot.slane %v1329, %v1333
    %v1336 = vmul.f32 %v1324, %v1334
    %v1337 = vld [vmem:[%s9] sm:$0x1]
    %v1339 = vlaneseq
    %v1340 = vshrl.u32 %v1339, 7
    %v1341 = vsub.s32 0, %v1340
    %v1342 = vrot.slane %v1337, %v1341
    %v1344 = vadd.f32 %v1336, %v1342
    %v1345 = vmax.f32 %v1344, 0.0
    %v1346 = vpack.c.bf16 %v1345, %v1345
    %v1347 = vld [vmem:[%s10] sm:$0xf]
    %v1348 = vld [vmem:[%s10 + $0x4] sm:$0xf]
    %v1349 = vld [vmem:[%s10 + $0x8] sm:$0xf]
    %v1350 = vld [vmem:[%s10 + $0xc] sm:$0xf]
    %v1351 = vld [vmem:[%s10 + $0x10] sm:$0xf]
    %v1352 = vld [vmem:[%s10 + $0x14] sm:$0xf]
    %v1353 = vld [vmem:[%s10 + $0x18] sm:$0xf]
    %v1354 = vld [vmem:[%s10 + $0x1c] sm:$0xf]
    %v1355 = vld [vmem:[%s11] sm:$0x1]
    %v1357 = vlaneseq
    %v1358 = vshrl.u32 %v1357, 7
    %v1359 = vsub.s32 0, %v1358
    %v1360 = vrot.slane %v1355, %v1359
    %v1370 = vunpack.c.l.b16 %v1347
    %v1371 = vunpack.c.l.b16 %v1348
    %v1372 = vunpack.c.l.b16 %v1349
    %v1373 = vunpack.c.l.b16 %v1350
    %v1374 = vunpack.c.l.b16 %v1351
    %v1375 = vunpack.c.l.b16 %v1352
    %v1376 = vunpack.c.l.b16 %v1353
    %v1377 = vunpack.c.l.b16 %v1354
    %v1378 = vpack.c.b16 %v1371, %v1370
    %v1379 = vpack.c.b16 %v1373, %v1372
    %v1380 = vpack.c.b16 %v1375, %v1374
    %v1381 = vpack.c.b16 %v1377, %v1376
    %vm1386 = vcmask 523264
    %v1388 = vsel %vm1386, %v1346, 0
    %1390 = vmatprep.subr.bf16.mxu0 0
    %1391 = vmatpush1.bf16.msra.mxu0 %v1378
    %1392 = vmatprep.subr.bf16.mxu0 0
    %1393 = vmatpush1.bf16.msra.mxu0 %v1379
    %1394 = vmatprep.subr.bf16.mxu0 0
    %1395 = vmatpush1.bf16.msra.mxu0 %v1380
    %1396 = vmatprep.subr.bf16.mxu0 0
    %1397 = vmatpush1.bf16.msra.mxu0 %v1381
    %1398 = vmatprep.subr.bf16.mxu0 0
    %1399 = vmatpush1.bf16.msra.mxu0 0
    %1400 = vmatprep.subr.bf16.mxu0 0
    %1401 = vmatpush1.bf16.msra.mxu0 0
    %1402 = vmatprep.subr.bf16.mxu0 0
    %1403 = vmatpush1.bf16.msra.mxu0 0
    %1404 = vmatprep.subr.bf16.mxu0 0
    %1405 = vmatpush1.bf16.msra.mxu0 0
    %1406 = vmatprep.subr.bf16.mxu0 0
    %1407 = vmatpush1.bf16.msra.mxu0 0
    %1408 = vmatprep.subr.bf16.mxu0 0
    %1409 = vmatpush1.bf16.msra.mxu0 0
    %1410 = vmatprep.subr.bf16.mxu0 0
    %1411 = vmatpush1.bf16.msra.mxu0 0
    %1412 = vmatprep.subr.bf16.mxu0 0
    %1413 = vmatpush1.bf16.msra.mxu0 0
    %1414 = vmatprep.subr.bf16.mxu0 0
    %1415 = vmatpush1.bf16.msra.mxu0 0
    %1416 = vmatprep.subr.bf16.mxu0 0
    %1417 = vmatpush1.bf16.msra.mxu0 0
    %1418 = vmatprep.subr.bf16.mxu0 0
    %1419 = vmatpush1.bf16.msra.mxu0 0
    %1420 = vmatprep.subr.bf16.mxu0 0
    %1421 = vmatpush1.bf16.msra.mxu0 0
    %1422 = vmatprep.mubr.bf16.mxu0 0
    %1423 = vmatmul.mubr.bf16.gmra.mrb[0].mxu0 %v1388
    %v1424 = vpop.f32.mrb[0].mxu0
    %v1425 = vadd.f32 %v1360, %v1424
    %v1426 = vpop.f32.mrb[0].mxu0
    %v1427 = vpop.f32.mrb[0].mxu0
    %v1428 = vpop.f32.mrb[0].mxu0
    %1429 = vdwg.mxu0
    %1430 = vst [vmem:[#allocation2] sm:$0xff] %v1425
    // Predicated region
    $region50: #{enhanced_nn_forward.1} parent=1 // pred_check
      _
    $region51: #{enhanced_nn_forward.1} parent=1 // pred_check_branch
      %1432 = sbr.rel (0) target = $region53
    $region52: #{enhanced_nn_forward.1} parent=1 // pred_region
      %s1434 = ssub.s32 128, 128
      %1435 = vsyncadd [#allocation3], %s1434
      %s1437 = sshll.u32 [#allocation2], 4
      %s1438 = int_to_ptr.vmem [resolvable:$true] %s1437
      %1440 = dma.vmem_to_hbm [thread:$0]  %s1438, 128, %s12, [#allocation3]
    $region53: #{enhanced_nn_forward.1} parent=1 // pred_fallthru
      _
    // Predicated region
    $region54: #{enhanced_nn_forward.1} parent=1 // pred_check
      _
    $region55: #{enhanced_nn_forward.1} parent=1 // pred_check_branch
      %1442 = sbr.rel (0) target = $region57
    $region56: #{enhanced_nn_forward.1} parent=1 // pred_region
      %1443 = dma.done [#allocation3], 128
    $region57: #{enhanced_nn_forward.1} parent=1 // pred_fallthru
      _
    %1444 = vsyncpa [#allocation3], 1

</llo_original>
